<compile_context>
chip_gen: v7x
topology: tpu7x:2x2x1
jax: 0.10.0
libtpu: 0.0.40
codegen_flags: <defaults>
</compile_context>

<pallas_src>
import functools
import math

import jax
import jax.numpy as jnp
from jax.experimental import pallas as pl
from jax.experimental.pallas import tpu as pltpu


def _round_up(x, m):
    return (x + m - 1) // m * m


def _cdiv(a, b):
    return (a + b - 1) // b


# -----------------------------------------------------------------------------
# Pallas kernel
# -----------------------------------------------------------------------------
def _decoder_kernel(
    x_ref,                       # (TM, input_dim)            f32
    w1_ref, b1_ref,              # (input_dim, 128), (1,128)  f32   resident
    w2_ref, b2_ref,              # (128, 64), (1, 64)         f32   resident
    g_ref, beta_ref,             # (1, 64), (1, 64)           f32   resident (LN affine)
    wh_ref, bh_ref,              # (64, TN) bf16, (1, TN) f32       fused heads
    out_ref,                     # (TM, TN)                   bf16
):
    # Trunk recomputed per tile (tiny vs the head matmul, hidden under DMA); this
    # removes cross-step scratch state so both grid axes can be "parallel" and the
    # N-outer grid order streams the head weight from HBM exactly once.
    x = x_ref[...]
    h1 = jnp.dot(x, w1_ref[...], preferred_element_type=jnp.float32) + b1_ref[...]
    h1 = jnp.maximum(h1, 0.0)
    h2 = jnp.dot(h1, w2_ref[...], preferred_element_type=jnp.float32) + b2_ref[...]
    # LayerNorm(64, eps=1e-6): biased variance, f32 math (no bf16 VPU on v5e).
    mean = jnp.mean(h2, axis=-1, keepdims=True)
    d = h2 - mean
    var = jnp.mean(d * d, axis=-1, keepdims=True)
    ln = (d * jax.lax.rsqrt(var + 1e-6)) * g_ref[...] + beta_ref[...]

    # Fused head: one lane-dense bf16 MXU matmul covering wu|wd|bu|bd (+padding),
    # f32 accumulation, bf16 store (TN is a multiple of 128 -> unmasked vst).
    acc = jnp.dot(ln.astype(jnp.bfloat16), wh_ref[...],
                  preferred_element_type=jnp.float32)
    out_ref[...] = (acc + bh_ref[...]).astype(out_ref.dtype)


# -----------------------------------------------------------------------------
# pallas_call wrapper: tiling / grid / compiler params
# -----------------------------------------------------------------------------
def _decoder_pallas(x, fp, *, tn, out_dtype=jnp.bfloat16):
    """x: (M, input_dim) f32 rows. Returns fused head output (M, N_pad) bf16."""
    M, input_dim = x.shape
    N_pad = fp["w_head"].shape[1]
    assert N_pad % tn == 0
    grid_n = N_pad // tn

    # Row tile: minimize padding (TM rounded to 16 for bf16-output sublane tiling).
    nm = max(1, _cdiv(M, 256))
    TM = _round_up(_cdiv(M, nm), 16)
    # v7x has 2 TensorCores: if the whole grid would be a single step, split the
    # row axis so both cores get work (no effect on single-TC v5e/v6e).
    if grid_n * nm == 1 and M > 16:
        nm = 2
        TM = _round_up(_cdiv(M, nm), 16)
    M_pad = nm * TM
    if M_pad != M:
        x = jnp.pad(x, ((0, M_pad - M), (0, 0)))

    grid = (grid_n, nm)            # N tiles OUTER, row tiles INNER

    def resident(shape):
        return pl.BlockSpec(shape, lambda j, i: (0, 0))

    trunk_flops_per_row = 2 * (input_dim * 128 + 128 * 64)
    flops = grid_n * M_pad * trunk_flops_per_row + 2 * M_pad * 64 * N_pad
    bytes_accessed = (
        grid_n * M_pad * input_dim * 4                         # x (re-read per N tile, tiny)
        + (input_dim * 128 + 128 + 128 * 64 + 3 * 64) * 4      # trunk weights
        + 64 * N_pad * 2 + N_pad * 4                           # fused head W (once) + bias
        + M_pad * N_pad * 2                                     # bf16 output
    )
    # VMEM budget: double-buffered tiled blocks + resident trunk + headroom.
    vmem_bytes = (
        2 * (TM * input_dim * 4 + 64 * tn * 2 + tn * 4 + TM * tn * 2)
        + 2 * (input_dim * 128 + 128 + 128 * 64 + 3 * 64) * 4
        + (4 << 20)
    )
    vmem_limit = int(min(max(vmem_bytes, 16 << 20), 48 << 20))  # fits v7x 64 MiB VMEM

    out = pl.pallas_call(
        _decoder_kernel,
        out_shape=jax.ShapeDtypeStruct((M_pad, N_pad), out_dtype),
        grid_spec=pltpu.PrefetchScalarGridSpec(
            num_scalar_prefetch=0,
            grid=grid,
            in_specs=[
                pl.BlockSpec((TM, input_dim), lambda j, i: (i, 0)),   # x rows
                resident((input_dim, 128)),                           # w1
                resident((1, 128)),                                   # b1
                resident((128, 64)),                                  # w2
                resident((1, 64)),                                    # b2
                resident((1, 64)),                                    # LN gamma
                resident((1, 64)),                                    # LN beta
                pl.BlockSpec((64, tn), lambda j, i: (0, j)),          # fused head W (bf16)
                pl.BlockSpec((1, tn), lambda j, i: (0, j)),           # fused head b
            ],
            out_specs=pl.BlockSpec((TM, tn), lambda j, i: (i, j)),
        ),
        compiler_params=pltpu.CompilerParams(
            dimension_semantics=("parallel", "parallel"),
            vmem_limit_bytes=vmem_limit,
        ),
        cost_estimate=pl.CostEstimate(
            flops=flops, transcendentals=grid_n * M_pad,
            bytes_accessed=bytes_accessed),
    )(
        x,
        fp["w1"], fp["b1"], fp["w2"], fp["b2"], fp["ln_g"], fp["ln_b"],
        fp["w_head"], fp["b_head"],
    )
    return out[:M]


# -----------------------------------------------------------------------------
# ParameterGenerator forward (glue in plain JAX, decoder in the Pallas kernel)
# -----------------------------------------------------------------------------
def parameter_generator_forward(hidden_inputs, fused, *, n_layer, splits, tn):
    B, cond_dim = hidden_inputs.shape
    emb = fused["layer_embed"]                                  # (n_layer, l_embed_dim)
    l_embed_dim = emb.shape[1]

    # concat([hidden_inputs, layer_embed(i)]) for every layer i -> (n_layer*B, input_dim)
    h = jnp.broadcast_to(hidden_inputs[None, :, :], (n_layer, B, cond_dim))
    e = jnp.broadcast_to(emb[:, None, :], (n_layer, B, l_embed_dim))
    x = jnp.concatenate([h, e], axis=-1).reshape(n_layer * B, cond_dim + l_embed_dim)

    out = _decoder_pallas(x, fused, tn=tn)                      # (n_layer*B, N_pad) bf16

    n_wu, n_wd, n_bu, n_bd = splits
    o = 0
    wu = out[:, o:o + n_wu]; o += n_wu
    wd = out[:, o:o + n_wd]; o += n_wd
    bu = out[:, o:o + n_bu]; o += n_bu
    bd = out[:, o:o + n_bd]

    def per_layer(a):
        return a.reshape(n_layer, B, a.shape[-1])

    wu, wd, bu, bd = per_layer(wu), per_layer(wd), per_layer(bu), per_layer(bd)
    # Same structure as PyTorch: list per layer of (weight_up, weight_down, bias_up, bias_down)
    return [(wu[i], wd[i], bu[i], bd[i]) for i in range(n_layer)]


# -----------------------------------------------------------------------------
# Parameter init (mirrors PyTorch module; weights stored transposed (in, out))
# and head fusion/padding done once at init time.
# -----------------------------------------------------------------------------
def init_params(key, *, n_layer, l_embed_dim, condition_dim, hidden_size, adapter_dim):
    input_dim = condition_dim + l_embed_dim
    keys = jax.random.split(key, 12)

    def torch_linear(kw, kb, fan_in, fan_out):
        bound = 1.0 / math.sqrt(fan_in)
        w = jax.random.uniform(kw, (fan_in, fan_out), jnp.float32, -bound, bound)
        b = jax.random.uniform(kb, (1, fan_out), jnp.float32, -bound, bound)
        return w, b

    def hyperfanin_weight(kw, fan_out, hypernet_in, mainnet_in):
        bound = 0.001 * math.sqrt(3.0 / (hypernet_in * mainnet_in))
        w = jax.random.uniform(kw, (64, fan_out), jnp.float32, -bound, bound)
        return w, jnp.zeros((1, fan_out), jnp.float32)

    def hyperfanin_bias(kw, fan_out, hypernet_in):
        bound = 0.001 * math.sqrt(3.0 / hypernet_in)
        w = jax.random.uniform(kw, (64, fan_out), jnp.float32, -bound, bound)
        return w, jnp.zeros((1, fan_out), jnp.float32)

    p = {}
    p["layer_embed"] = jax.random.normal(keys[0], (n_layer, l_embed_dim), jnp.float32)
    p["w1"], p["b1"] = torch_linear(keys[1], keys[2], input_dim, 128)
    p["w2"], p["b2"] = torch_linear(keys[3], keys[4], 128, 64)
    p["ln_g"] = jnp.ones((1, 64), jnp.float32)
    p["ln_b"] = jnp.zeros((1, 64), jnp.float32)
    p["wu"], p["bu"] = hyperfanin_weight(keys[5], hidden_size * adapter_dim, 64, adapter_dim)
    p["wd"], p["bd"] = hyperfanin_weight(keys[6], hidden_size * adapter_dim, 64, hidden_size)
    p["wbu"], p["bbu"] = hyperfanin_bias(keys[7], hidden_size, 64)
    p["wbd"], p["bbd"] = hyperfanin_bias(keys[8], adapter_dim, 64)
    return p


def fuse_params(p, *, tn_max=8192):
    """Fuse the four heads into one lane-dense (64, N_pad) bf16 weight + f32 bias.

    N padding stays 128-aligned; the column tile TN is chosen so N_pad % TN == 0
    and TN <= tn_max (no more jumping to 1024-alignment).  Returns (fused, splits, tn).
    """
    w_head = jnp.concatenate([p["wu"], p["wd"], p["wbu"], p["wbd"]], axis=1)
    b_head = jnp.concatenate([p["bu"], p["bd"], p["bbu"], p["bbd"]], axis=1)
    splits = (p["wu"].shape[1], p["wd"].shape[1], p["wbu"].shape[1], p["wbd"].shape[1])

    n_total = w_head.shape[1]
    n_tiles = _cdiv(n_total, tn_max)
    tn = _round_up(_cdiv(n_total, n_tiles), 128)
    n_pad = n_tiles * tn
    if n_pad != n_total:
        w_head = jnp.pad(w_head, ((0, 0), (0, n_pad - n_total)))
        b_head = jnp.pad(b_head, ((0, 0), (0, n_pad - n_total)))

    fused = dict(
        layer_embed=p["layer_embed"],
        w1=p["w1"], b1=p["b1"], w2=p["w2"], b2=p["b2"],
        ln_g=p["ln_g"], ln_b=p["ln_b"],
        w_head=w_head.astype(jnp.bfloat16),    # bf16 stream of the dominant weight
        b_head=b_head,
    )
    return fused, splits, tn


# -----------------------------------------------------------------------------
# Pure-JAX f32 reference (matches the PyTorch forward) for a sanity check.
# -----------------------------------------------------------------------------
def _reference_forward(hidden_inputs, p, n_layer):
    B = hidden_inputs.shape[0]
    layers = []
    for i in range(n_layer):
        le = jnp.broadcast_to(p["layer_embed"][i][None, :], (B, p["layer_embed"].shape[1]))
        x = jnp.concatenate([hidden_inputs, le], axis=1)
        h1 = jnp.maximum(x @ p["w1"] + p["b1"], 0.0)
        h2 = h1 @ p["w2"] + p["b2"]
        mean = jnp.mean(h2, axis=-1, keepdims=True)
        var = jnp.mean((h2 - mean) ** 2, axis=-1, keepdims=True)
        ln = (h2 - mean) / jnp.sqrt(var + 1e-6) * p["ln_g"] + p["ln_b"]
        layers.append((
            ln @ p["wu"] + p["bu"],
            ln @ p["wd"] + p["bd"],
            ln @ p["wbu"] + p["bbu"],
            ln @ p["wbd"] + p["bbd"],
        ))
    return layers


if __name__ == "__main__":
    # Small synthetic config consistent with the module.
    n_layer = 4
    l_embed_dim = 8
    condition_dim = 24
    hidden_size = 32
    adapter_dim = 4
    batch = 2

    key = jax.random.PRNGKey(0)
    k_params, k_input = jax.random.split(key)

    raw = init_params(
        k_params,
        n_layer=n_layer,
        l_embed_dim=l_embed_dim,
        condition_dim=condition_dim,
        hidden_size=hidden_size,
        adapter_dim=adapter_dim,
    )
    fused, splits, tn = fuse_params(raw)
    hidden_inputs = jax.random.normal(k_input, (batch, condition_dim), jnp.float32)

    fwd = jax.jit(functools.partial(
        parameter_generator_forward, n_layer=n_layer, splits=splits, tn=tn))
    layers = fwd(hidden_inputs, fused)
    jax.block_until_ready(layers)

    # Sanity check vs f32 reference.  Outputs are bf16 (per perf review: the kernel
    # is HBM-write bound) -> tolerance absorbs bf16 quantization of ln / w_head / out.
    ref = _reference_forward(hidden_inputs, raw, n_layer)
    for a_tup, r_tup in zip(layers, ref):
        for a, r in zip(a_tup, r_tup):
            assert a.shape == r.shape
            a32 = a.astype(jnp.float32)
            assert jnp.allclose(a32, r, atol=2e-4, rtol=3e-2), float(jnp.max(jnp.abs(a32 - r)))

    print("KERNEL_OK")
</pallas_src>

<mosaic_0001>
module attributes {stable_mosaic.version = 11 : i64} {
  func.func @_decoder_kernel(%arg0: i32, %arg1: i32, %arg2: memref<16x32xf32, #tpu.memory_space<vmem>>, %arg3: memref<32x128xf32, #tpu.memory_space<vmem>>, %arg4: memref<1x128xf32, #tpu.memory_space<vmem>>, %arg5: memref<128x64xf32, #tpu.memory_space<vmem>>, %arg6: memref<1x64xf32, #tpu.memory_space<vmem>>, %arg7: memref<1x64xf32, #tpu.memory_space<vmem>>, %arg8: memref<1x64xf32, #tpu.memory_space<vmem>>, %arg9: memref<64x384xbf16, #tpu.memory_space<vmem>>, %arg10: memref<1x384xf32, #tpu.memory_space<vmem>>, %arg11: memref<16x384xbf16, #tpu.memory_space<vmem>>) attributes {dimension_semantics = [#tpu.dimension_semantics<parallel>, #tpu.dimension_semantics<parallel>], iteration_bounds = array<i64: 1, 1>, scalar_prefetch = 0 : i64, scratch_operands = 0 : i64, tpu.core_type = #tpu.core_type<tc>, window_params = [{transform_indices = @transform_0, window_bounds = array<i64: 16, 32>}, {pipeline_mode = #tpu.pipeline_mode<synchronous>, transform_indices = @transform_1, window_bounds = array<i64: 32, 128>}, {pipeline_mode = #tpu.pipeline_mode<synchronous>, transform_indices = @transform_2, window_bounds = array<i64: 1, 128>}, {pipeline_mode = #tpu.pipeline_mode<synchronous>, transform_indices = @transform_3, window_bounds = array<i64: 128, 64>}, {pipeline_mode = #tpu.pipeline_mode<synchronous>, transform_indices = @transform_4, window_bounds = array<i64: 1, 64>}, {pipeline_mode = #tpu.pipeline_mode<synchronous>, transform_indices = @transform_5, window_bounds = array<i64: 1, 64>}, {pipeline_mode = #tpu.pipeline_mode<synchronous>, transform_indices = @transform_6, window_bounds = array<i64: 1, 64>}, {transform_indices = @transform_7, window_bounds = array<i64: 64, 384>}, {transform_indices = @transform_8, window_bounds = array<i64: 1, 384>}, {transform_indices = @transform_9, window_bounds = array<i64: 16, 384>}]} {
    %c0 = arith.constant 0 : index
    %c0_0 = arith.constant 0 : index
    %0 = vector.load %arg2[%c0, %c0_0] : memref<16x32xf32, #tpu.memory_space<vmem>>, vector<16x32xf32>
    %c0_1 = arith.constant 0 : index
    %c0_2 = arith.constant 0 : index
    %1 = vector.load %arg3[%c0_1, %c0_2] : memref<32x128xf32, #tpu.memory_space<vmem>>, vector<32x128xf32>
    %cst = arith.constant dense<0.000000e+00> : vector<16x128xf32>
    %2 = tpu.matmul %0, %1, %cst {dimension_numbers = #tpu.dot_dimension_numbers<[1], [0], [0], [1], [0, 0, 1, 1], [], []>} : vector<16x32xf32>, vector<32x128xf32>, vector<16x128xf32> -> vector<16x128xf32>
    %c0_3 = arith.constant 0 : index
    %c0_4 = arith.constant 0 : index
    %3 = vector.load %arg4[%c0_3, %c0_4] : memref<1x128xf32, #tpu.memory_space<vmem>>, vector<1x128xf32>
    %4 = vector.broadcast %3 : vector<1x128xf32> to vector<16x128xf32>
    %5 = arith.addf %2, %4 : vector<16x128xf32>
    %cst_5 = arith.constant 0.000000e+00 : f32
    %6 = vector.broadcast %cst_5 : f32 to vector<16x128xf32>
    %7 = arith.maximumf %5, %6 : vector<16x128xf32>
    %c0_6 = arith.constant 0 : index
    %c0_7 = arith.constant 0 : index
    %8 = vector.load %arg5[%c0_6, %c0_7] : memref<128x64xf32, #tpu.memory_space<vmem>>, vector<128x64xf32>
    %cst_8 = arith.constant dense<0.000000e+00> : vector<16x64xf32>
    %9 = tpu.matmul %7, %8, %cst_8 {dimension_numbers = #tpu.dot_dimension_numbers<[1], [0], [0], [1], [0, 0, 1, 1], [], []>} : vector<16x128xf32>, vector<128x64xf32>, vector<16x64xf32> -> vector<16x64xf32>
    %c0_9 = arith.constant 0 : index
    %c0_10 = arith.constant 0 : index
    %10 = vector.load %arg6[%c0_9, %c0_10] : memref<1x64xf32, #tpu.memory_space<vmem>>, vector<1x64xf32>
    %11 = vector.broadcast %10 : vector<1x64xf32> to vector<16x64xf32>
    %12 = arith.addf %9, %11 : vector<16x64xf32>
    %cst_11 = arith.constant dense<0.000000e+00> : vector<16xf32>
    %13 = vector.multi_reduction <add>, %12, %cst_11 [1] : vector<16x64xf32> to vector<16xf32>
    %14 = vector.shape_cast %13 : vector<16xf32> to vector<16x1xf32>
    %cst_12 = arith.constant 6.400000e+01 : f32
    %15 = vector.broadcast %cst_12 : f32 to vector<16x1xf32>
    %16 = arith.divf %14, %15 : vector<16x1xf32>
    %17 = vector.broadcast %16 : vector<16x1xf32> to vector<16x64xf32>
    %18 = arith.subf %12, %17 : vector<16x64xf32>
    %19 = arith.mulf %18, %18 : vector<16x64xf32>
    %cst_13 = arith.constant dense<0.000000e+00> : vector<16xf32>
    %20 = vector.multi_reduction <add>, %19, %cst_13 [1] : vector<16x64xf32> to vector<16xf32>
    %21 = vector.shape_cast %20 : vector<16xf32> to vector<16x1xf32>
    %cst_14 = arith.constant 6.400000e+01 : f32
    %22 = vector.broadcast %cst_14 : f32 to vector<16x1xf32>
    %23 = arith.divf %21, %22 : vector<16x1xf32>
    %cst_15 = arith.constant 9.99999997E-7 : f32
    %24 = vector.broadcast %cst_15 : f32 to vector<16x1xf32>
    %25 = arith.addf %23, %24 : vector<16x1xf32>
    %26 = math.rsqrt %25 : vector<16x1xf32>
    %27 = vector.broadcast %26 : vector<16x1xf32> to vector<16x64xf32>
    %28 = arith.mulf %18, %27 : vector<16x64xf32>
    %c0_16 = arith.constant 0 : index
    %c0_17 = arith.constant 0 : index
    %29 = vector.load %arg7[%c0_16, %c0_17] : memref<1x64xf32, #tpu.memory_space<vmem>>, vector<1x64xf32>
    %30 = vector.broadcast %29 : vector<1x64xf32> to vector<16x64xf32>
    %31 = arith.mulf %28, %30 : vector<16x64xf32>
    %c0_18 = arith.constant 0 : index
    %c0_19 = arith.constant 0 : index
    %32 = vector.load %arg8[%c0_18, %c0_19] : memref<1x64xf32, #tpu.memory_space<vmem>>, vector<1x64xf32>
    %33 = vector.broadcast %32 : vector<1x64xf32> to vector<16x64xf32>
    %34 = arith.addf %31, %33 : vector<16x64xf32>
    %35 = arith.truncf %34 : vector<16x64xf32> to vector<16x64xbf16>
    %c0_20 = arith.constant 0 : index
    %c0_21 = arith.constant 0 : index
    %36 = vector.load %arg9[%c0_20, %c0_21] : memref<64x384xbf16, #tpu.memory_space<vmem>>, vector<64x384xbf16>
    %cst_22 = arith.constant dense<0.000000e+00> : vector<16x384xf32>
    %37 = tpu.matmul %35, %36, %cst_22 {dimension_numbers = #tpu.dot_dimension_numbers<[1], [0], [0], [1], [0, 0, 1, 1], [], []>} : vector<16x64xbf16>, vector<64x384xbf16>, vector<16x384xf32> -> vector<16x384xf32>
    %c0_23 = arith.constant 0 : index
    %c0_24 = arith.constant 0 : index
    %38 = vector.load %arg10[%c0_23, %c0_24] : memref<1x384xf32, #tpu.memory_space<vmem>>, vector<1x384xf32>
    %39 = vector.broadcast %38 : vector<1x384xf32> to vector<16x384xf32>
    %40 = arith.addf %37, %39 : vector<16x384xf32>
    %41 = arith.truncf %40 : vector<16x384xf32> to vector<16x384xbf16>
    %c0_25 = arith.constant 0 : index
    %c0_26 = arith.constant 0 : index
    %42 = vector.load %arg11[%c0_25, %c0_26] : memref<16x384xbf16, #tpu.memory_space<vmem>>, vector<16x384xbf16>
    tpu.vector_store %arg11[%c0_25, %c0_26], %41 {strides = array<i32>} : memref<16x384xbf16, #tpu.memory_space<vmem>>, vector<16x384xbf16>,
    return
  }
  func.func @transform_0(%arg0: i32, %arg1: i32) -> (i32, i32) {
    %c0_i32 = arith.constant 0 : i32
    %c0_i32_0 = arith.constant 0 : i32
    return %arg1, %c0_i32 : i32, i32
  }
  func.func @transform_1(%arg0: i32, %arg1: i32) -> (i32, i32) {
    %c0_i32 = arith.constant 0 : i32
    %c0_i32_0 = arith.constant 0 : i32
    %c0_i32_1 = arith.constant 0 : i32
    return %c0_i32, %c0_i32_0 : i32, i32
  }
  func.func @transform_2(%arg0: i32, %arg1: i32) -> (i32, i32) {
    %c0_i32 = arith.constant 0 : i32
    %c0_i32_0 = arith.constant 0 : i32
    %c0_i32_1 = arith.constant 0 : i32
    return %c0_i32, %c0_i32_0 : i32, i32
  }
  func.func @transform_3(%arg0: i32, %arg1: i32) -> (i32, i32) {
    %c0_i32 = arith.constant 0 : i32
    %c0_i32_0 = arith.constant 0 : i32
    %c0_i32_1 = arith.constant 0 : i32
    return %c0_i32, %c0_i32_0 : i32, i32
  }
  func.func @transform_4(%arg0: i32, %arg1: i32) -> (i32, i32) {
    %c0_i32 = arith.constant 0 : i32
    %c0_i32_0 = arith.constant 0 : i32
    %c0_i32_1 = arith.constant 0 : i32
    return %c0_i32, %c0_i32_0 : i32, i32
  }
  func.func @transform_5(%arg0: i32, %arg1: i32) -> (i32, i32) {
    %c0_i32 = arith.constant 0 : i32
    %c0_i32_0 = arith.constant 0 : i32
    %c0_i32_1 = arith.constant 0 : i32
    return %c0_i32, %c0_i32_0 : i32, i32
  }
  func.func @transform_6(%arg0: i32, %arg1: i32) -> (i32, i32) {
    %c0_i32 = arith.constant 0 : i32
    %c0_i32_0 = arith.constant 0 : i32
    %c0_i32_1 = arith.constant 0 : i32
    return %c0_i32, %c0_i32_0 : i32, i32
  }
  func.func @transform_7(%arg0: i32, %arg1: i32) -> (i32, i32) {
    %c0_i32 = arith.constant 0 : i32
    %c0_i32_0 = arith.constant 0 : i32
    return %c0_i32, %arg0 : i32, i32
  }
  func.func @transform_8(%arg0: i32, %arg1: i32) -> (i32, i32) {
    %c0_i32 = arith.constant 0 : i32
    %c0_i32_0 = arith.constant 0 : i32
    return %c0_i32, %arg0 : i32, i32
  }
  func.func @transform_9(%arg0: i32, %arg1: i32) -> (i32, i32) {
    %c0_i32 = arith.constant 0 : i32
    return %arg1, %arg0 : i32, i32
  }
}

</mosaic_0001>

<llo_original>
// kernel: parameter_generator_forward.1
$region0: #{parameter_generator_forward.1}
  #allocation0 [shape = 'u32[]', space=smem, size = 0x4, offset = 0x4, fixed_abs, tag = 'smem constant byte address 0x4 - core index']
  #allocation1 [shape = 'u32[144,128]{1,0:T(1,128)}', space=vmem, size = 0x12000, scoped, tag = 'internal scratch']
  %s0 = inlined_call_operand.vmem [shape: f32[16,32], index: 0, kind: input, shape index: {}]
  %s1 = inlined_call_operand.vmem [shape: f32[32,128], index: 1, kind: input, shape index: {}]
  %s2 = inlined_call_operand.vmem [shape: f32[1,128], index: 2, kind: input, shape index: {}]
  %s3 = inlined_call_operand.vmem [shape: f32[128,64], index: 3, kind: input, shape index: {}]
  %s4 = inlined_call_operand.vmem [shape: f32[1,64], index: 4, kind: input, shape index: {}]
  %s5 = inlined_call_operand.vmem [shape: f32[1,64], index: 5, kind: input, shape index: {}]
  %s6 = inlined_call_operand.vmem [shape: f32[1,64], index: 6, kind: input, shape index: {}]
  %s7 = inlined_call_operand.vmem [shape: bf16[64,384], index: 7, kind: input, shape index: {}]
  %s8 = inlined_call_operand.vmem [shape: f32[1,384], index: 8, kind: input, shape index: {}]
  %s9 = inlined_call_operand.vmem [shape: bf16[16,384], index: 9, kind: output, shape index: {}]
  %s10 = sld [smem:[#allocation0]]
  $region46: #{parameter_generator_forward.1} parent=0
    _
  %s12 = ssub.s32 1, %s10
  %s13 = scalar_select 0, %s12, %s10
  // Predicated region
  $region2: #{parameter_generator_forward.1} parent=0 // pred_check
    _
  $region3: #{parameter_generator_forward.1} parent=0 // pred_check_branch
    %15 = sbr.rel (0) target = $region5
  $region4: #{parameter_generator_forward.1} parent=0 // pred_region
    _
  $region5: #{parameter_generator_forward.1} parent=0 // pred_fallthru
    _
  // Predicated region
  $region6: #{parameter_generator_forward.1} parent=0 // pred_check
    _
  $region7: #{parameter_generator_forward.1} parent=0 // pred_check_branch
    %17 = sbr.rel (0) target = $region9
  $region8: #{parameter_generator_forward.1} parent=0 // pred_region
    _
  $region9: #{parameter_generator_forward.1} parent=0 // pred_fallthru
    _
  // Predicated region
  $region10: #{parameter_generator_forward.1} parent=0 // pred_check
    _
  $region11: #{parameter_generator_forward.1} parent=0 // pred_check_branch
    %19 = sbr.rel (0) target = $region13
  $region12: #{parameter_generator_forward.1} parent=0 // pred_region
    _
  $region13: #{parameter_generator_forward.1} parent=0 // pred_fallthru
    _
  // Predicated region
  $region14: #{parameter_generator_forward.1} parent=0 // pred_check
    _
  $region15: #{parameter_generator_forward.1} parent=0 // pred_check_branch
    %21 = sbr.rel (0) target = $region17
  $region16: #{parameter_generator_forward.1} parent=0 // pred_region
    _
  $region17: #{parameter_generator_forward.1} parent=0 // pred_fallthru
    _
  // Predicated region
  $region18: #{parameter_generator_forward.1} parent=0 // pred_check
    _
  $region19: #{parameter_generator_forward.1} parent=0 // pred_check_branch
    %23 = sbr.rel (0) target = $region21
  $region20: #{parameter_generator_forward.1} parent=0 // pred_region
    _
  $region21: #{parameter_generator_forward.1} parent=0 // pred_fallthru
    _
  // Predicated region
  $region22: #{parameter_generator_forward.1} parent=0 // pred_check
    _
  $region23: #{parameter_generator_forward.1} parent=0 // pred_check_branch
    %25 = sbr.rel (0) target = $region25
  $region24: #{parameter_generator_forward.1} parent=0 // pred_region
    _
  $region25: #{parameter_generator_forward.1} parent=0 // pred_fallthru
    _
  // Predicated region
  $region26: #{parameter_generator_forward.1} parent=0 // pred_check
    _
  $region27: #{parameter_generator_forward.1} parent=0 // pred_check_branch
    %27 = sbr.rel (0) target = $region29
  $region28: #{parameter_generator_forward.1} parent=0 // pred_region
    _
  $region29: #{parameter_generator_forward.1} parent=0 // pred_fallthru
    _
  // Predicated region
  $region30: #{parameter_generator_forward.1} parent=0 // pred_check
    _
  $region31: #{parameter_generator_forward.1} parent=0 // pred_check_branch
    %29 = sbr.rel (0) target = $region33
  $region32: #{parameter_generator_forward.1} parent=0 // pred_region
    _
  $region33: #{parameter_generator_forward.1} parent=0 // pred_fallthru
    _
  // Predicated region
  $region34: #{parameter_generator_forward.1} parent=0 // pred_check
    _
  $region35: #{parameter_generator_forward.1} parent=0 // pred_check_branch
    %31 = sbr.rel (0) target = $region37
  $region36: #{parameter_generator_forward.1} parent=0 // pred_region
    _
  $region37: #{parameter_generator_forward.1} parent=0 // pred_fallthru
    _
  %v33 = vld [vmem:[%s0] sm:$0xff]
  %v34 = vld [vmem:[%s0 + $0x8] sm:$0xff]
  %v35 = vld [vmem:[%s1] sm:$0xff]
  %v36 = vld [vmem:[%s1 + $0x8] sm:$0xff]
  %v37 = vld [vmem:[%s1 + $0x10] sm:$0xff]
  %v38 = vld [vmem:[%s1 + $0x18] sm:$0xff]
  %v39 = vld [vmem:[%s2] sm:$0x1]
  %v41 = vlaneseq
  %v42 = vshrl.u32 %v41, 7
  %v43 = vsub.s32 0, %v42
  %v44 = vrot.slane %v39, %v43
  %vm46 = vcmask 261120
  %v48 = vsel %vm46, %v33, 0
  %v51 = vsel %vm46, %v34, 0
  %53 = vmatprep.subr.mxu0 0.0
  %54 = vmatpush1.msra.mxu0 %v35
  %55 = vmatprep.subr.mxu0 0.0
  %56 = vmatpush1.msra.mxu0 %v36
  %57 = vmatprep.subr.mxu0 0.0
  %58 = vmatpush1.msra.mxu0 %v37
  %59 = vmatprep.subr.mxu0 0.0
  %60 = vmatpush1.msra.mxu0 %v38
  %61 = vmatprep.subr.mxu0 0.0
  %62 = vmatpush1.msra.mxu0 0.0
  %63 = vmatprep.subr.mxu0 0.0
  %64 = vmatpush1.msra.mxu0 0.0
  %65 = vmatprep.subr.mxu0 0.0
  %66 = vmatpush1.msra.mxu0 0.0
  %67 = vmatprep.subr.mxu0 0.0
  %68 = vmatpush1.msra.mxu0 0.0
  %69 = vmatprep.subr.mxu0 0.0
  %70 = vmatpush1.msra.mxu0 0.0
  %71 = vmatprep.subr.mxu0 0.0
  %72 = vmatpush1.msra.mxu0 0.0
  %73 = vmatprep.subr.mxu0 0.0
  %74 = vmatpush1.msra.mxu0 0.0
  %75 = vmatprep.subr.mxu0 0.0
  %76 = vmatpush1.msra.mxu0 0.0
  %77 = vmatprep.subr.mxu0 0.0
  %78 = vmatpush1.msra.mxu0 0.0
  %79 = vmatprep.subr.mxu0 0.0
  %80 = vmatpush1.msra.mxu0 0.0
  %81 = vmatprep.subr.mxu0 0.0
  %82 = vmatpush1.msra.mxu0 0.0
  %83 = vmatprep.subr.mxu0 0.0
  %84 = vmatpush1.msra.mxu0 0.0
  %85 = vmatprep.subr.mxu0 0.0
  %86 = vmatpush1.msra.mxu0 0.0
  %87 = vmatprep.subr.mxu0 0.0
  %88 = vmatpush1.msra.mxu0 0.0
  %89 = vmatprep.subr.mxu0 0.0
  %90 = vmatpush1.msra.mxu0 0.0
  %91 = vmatprep.subr.mxu0 0.0
  %92 = vmatpush1.msra.mxu0 0.0
  %93 = vmatprep.subr.mxu0 0.0
  %94 = vmatpush1.msra.mxu0 0.0
  %95 = vmatprep.subr.mxu0 0.0
  %96 = vmatpush1.msra.mxu0 0.0
  %97 = vmatprep.subr.mxu0 0.0
  %98 = vmatpush1.msra.mxu0 0.0
  %99 = vmatprep.subr.mxu0 0.0
  %100 = vmatpush1.msra.mxu0 0.0
  %101 = vmatprep.subr.mxu0 0.0
  %102 = vmatpush1.msra.mxu0 0.0
  %103 = vmatprep.subr.mxu0 0.0
  %104 = vmatpush1.msra.mxu0 0.0
  %105 = vmatprep.subr.mxu0 0.0
  %106 = vmatpush1.msra.mxu0 0.0
  %107 = vmatprep.subr.mxu0 0.0
  %108 = vmatpush1.msra.mxu0 0.0
  %109 = vmatprep.subr.mxu0 0.0
  %110 = vmatpush1.msra.mxu0 0.0
  %111 = vmatprep.subr.mxu0 0.0
  %112 = vmatpush1.msra.mxu0 0.0
  %113 = vmatprep.subr.mxu0 0.0
  %114 = vmatpush1.msra.mxu0 0.0
  %115 = vmatprep.subr.mxu0 0.0
  %116 = vmatpush1.msra.mxu0 0.0
  %117 = vmatprep.mubr.f32.mxu0 0.0
  %118 = vmatmul.mubr.f32.gmra.mrb[0].mxu0 %v48
  %v119 = vpop.f32.mrb[0].mxu0
  %v120 = vadd.f32 %v44, %v119
  %v121 = vpop.f32.mrb[0].mxu0
  %122 = vmatprep.mubr.f32.mxu0 0.0
  %123 = vmatmul.mubr.f32.gmra.mrb[0].mxu0 %v51
  %v124 = vpop.f32.mrb[0].mxu0
  %v125 = vadd.f32 %v44, %v124
  %v126 = vpop.f32.mrb[0].mxu0
  %127 = vdwg.mxu0
  %v128 = vmax.f32 %v120, 0.0
  %v129 = vmax.f32 %v125, 0.0
  %v130 = vld [vmem:[%s3] sm:$0xff]
  %v131 = vld [vmem:[%s3 + $0x8] sm:$0xff]
  %v132 = vld [vmem:[%s3 + $0x10] sm:$0xff]
  %v133 = vld [vmem:[%s3 + $0x18] sm:$0xff]
  %v134 = vld [vmem:[%s3 + $0x20] sm:$0xff]
  %v135 = vld [vmem:[%s3 + $0x28] sm:$0xff]
  %v136 = vld [vmem:[%s3 + $0x30] sm:$0xff]
  %v137 = vld [vmem:[%s3 + $0x38] sm:$0xff]
  %v138 = vld [vmem:[%s3 + $0x40] sm:$0xff]
  %v139 = vld [vmem:[%s3 + $0x48] sm:$0xff]
  %v140 = vld [vmem:[%s3 + $0x50] sm:$0xff]
  %v141 = vld [vmem:[%s3 + $0x58] sm:$0xff]
  %v142 = vld [vmem:[%s3 + $0x60] sm:$0xff]
  %v143 = vld [vmem:[%s3 + $0x68] sm:$0xff]
  %v144 = vld [vmem:[%s3 + $0x70] sm:$0xff]
  %v145 = vld [vmem:[%s3 + $0x78] sm:$0xff]
  %v146 = vld [vmem:[%s4] sm:$0x1]
  %v148 = vlaneseq
  %v149 = vshrl.u32 %v148, 7
  %v150 = vsub.s32 0, %v149
  %v151 = vrot.slane %v146, %v150
  %153 = vmatprep.subr.mxu0 0.0
  %154 = vmatpush1.msra.mxu0 %v130
  %155 = vmatprep.subr.mxu0 0.0
  %156 = vmatpush1.msra.mxu0 %v131
  %157 = vmatprep.subr.mxu0 0.0
  %158 = vmatpush1.msra.mxu0 %v132
  %159 = vmatprep.subr.mxu0 0.0
  %160 = vmatpush1.msra.mxu0 %v133
  %161 = vmatprep.subr.mxu0 0.0
  %162 = vmatpush1.msra.mxu0 %v134
  %163 = vmatprep.subr.mxu0 0.0
  %164 = vmatpush1.msra.mxu0 %v135
  %165 = vmatprep.subr.mxu0 0.0
  %166 = vmatpush1.msra.mxu0 %v136
  %167 = vmatprep.subr.mxu0 0.0
  %168 = vmatpush1.msra.mxu0 %v137
  %169 = vmatprep.subr.mxu0 0.0
  %170 = vmatpush1.msra.mxu0 %v138
  %171 = vmatprep.subr.mxu0 0.0
  %172 = vmatpush1.msra.mxu0 %v139
  %173 = vmatprep.subr.mxu0 0.0
  %174 = vmatpush1.msra.mxu0 %v140
  %175 = vmatprep.subr.mxu0 0.0
  %176 = vmatpush1.msra.mxu0 %v141
  %177 = vmatprep.subr.mxu0 0.0
  %178 = vmatpush1.msra.mxu0 %v142
  %179 = vmatprep.subr.mxu0 0.0
  %180 = vmatpush1.msra.mxu0 %v143
  %181 = vmatprep.subr.mxu0 0.0
  %182 = vmatpush1.msra.mxu0 %v144
  %183 = vmatprep.subr.mxu0 0.0
  %184 = vmatpush1.msra.mxu0 %v145
  %185 = vmatprep.subr.mxu0 0.0
  %186 = vmatpush1.msra.mxu0 0.0
  %187 = vmatprep.subr.mxu0 0.0
  %188 = vmatpush1.msra.mxu0 0.0
  %189 = vmatprep.subr.mxu0 0.0
  %190 = vmatpush1.msra.mxu0 0.0
  %191 = vmatprep.subr.mxu0 0.0
  %192 = vmatpush1.msra.mxu0 0.0
  %193 = vmatprep.subr.mxu0 0.0
  %194 = vmatpush1.msra.mxu0 0.0
  %195 = vmatprep.subr.mxu0 0.0
  %196 = vmatpush1.msra.mxu0 0.0
  %197 = vmatprep.subr.mxu0 0.0
  %198 = vmatpush1.msra.mxu0 0.0
  %199 = vmatprep.subr.mxu0 0.0
  %200 = vmatpush1.msra.mxu0 0.0
  %201 = vmatprep.subr.mxu0 0.0
  %202 = vmatpush1.msra.mxu0 0.0
  %203 = vmatprep.subr.mxu0 0.0
  %204 = vmatpush1.msra.mxu0 0.0
  %205 = vmatprep.subr.mxu0 0.0
  %206 = vmatpush1.msra.mxu0 0.0
  %207 = vmatprep.subr.mxu0 0.0
  %208 = vmatpush1.msra.mxu0 0.0
  %209 = vmatprep.subr.mxu0 0.0
  %210 = vmatpush1.msra.mxu0 0.0
  %211 = vmatprep.subr.mxu0 0.0
  %212 = vmatpush1.msra.mxu0 0.0
  %213 = vmatprep.subr.mxu0 0.0
  %214 = vmatpush1.msra.mxu0 0.0
  %215 = vmatprep.subr.mxu0 0.0
  %216 = vmatpush1.msra.mxu0 0.0
  %217 = vmatprep.mubr.f32.mxu0 0.0
  %218 = vmatmul.mubr.f32.gmra.mrb[0].mxu0 %v128
  %v219 = vpop.f32.mrb[0].mxu0
  %v220 = vadd.f32 %v151, %v219
  %v221 = vpop.f32.mrb[0].mxu0
  %222 = vmatprep.mubr.f32.mxu0 0.0
  %223 = vmatmul.mubr.f32.gmra.mrb[0].mxu0 %v129
  %v224 = vpop.f32.mrb[0].mxu0
  %v225 = vadd.f32 %v151, %v224
  %v226 = vpop.f32.mrb[0].mxu0
  %227 = vdwg.mxu0
  %vm228 = vcmask 523264
  %v229 = vsel %vm228, %v220, 0.0
  %230 = vadd.xlane.f32.xlu0 %v229
  %v231 = vpop.xlane.xlu0 %230
  %v232 = vsel %vm228, %v225, 0.0
  %233 = vadd.xlane.f32.xlu0 %v232
  %v234 = vpop.xlane.xlu0 %233
  %v235 = vrcp.pop 64.0
  %v236 = vmul.f32 %v231, %v235
  %v237 = vmul.f32 %v234, %v235
  %v238 = vsub.f32 %v220, %v236
  %v239 = vsub.f32 %v225, %v237
  %v240 = vmul.f32 %v238, %v238
  %v241 = vmul.f32 %v239, %v239
  %v242 = vsel %vm228, %v240, 0.0
  %243 = vadd.xlane.f32.xlu0 %v242
  %v244 = vpop.xlane.xlu0 %243
  %v245 = vsel %vm228, %v241, 0.0
  %246 = vadd.xlane.f32.xlu0 %v245
  %v247 = vpop.xlane.xlu0 %246
  %v248 = vmul.f32 %v244, %v235
  %v249 = vmul.f32 %v247, %v235
  %v250 = vadd.f32 %v248, 1e-06
  %v251 = vadd.f32 %v249, 1e-06
  %v252 = vrsqrt.pop %v250
  %v253 = vrsqrt.pop %v251
  %v254 = vmul.f32 %v238, %v252
  %v255 = vmul.f32 %v239, %v253
  %v256 = vld [vmem:[%s5] sm:$0x1]
  %v258 = vlaneseq
  %v259 = vshrl.u32 %v258, 7
  %v260 = vsub.s32 0, %v259
  %v261 = vrot.slane %v256, %v260
  %v263 = vmul.f32 %v254, %v261
  %v264 = vmul.f32 %v255, %v261
  %v265 = vld [vmem:[%s6] sm:$0x1]
  %v267 = vlaneseq
  %v268 = vshrl.u32 %v267, 7
  %v269 = vsub.s32 0, %v268
  %v270 = vrot.slane %v265, %v269
  %v272 = vadd.f32 %v263, %v270
  %v273 = vadd.f32 %v264, %v270
  %v274 = vpack.c.bf16 %v273, %v272
  %v275 = vld [vmem:[%s7] sm:$0xff]
  %v276 = vld [vmem:[%s7 + $0x8] sm:$0xf]
  %v277 = vld [vmem:[%s7 + $0xc] sm:$0xff]
  %v278 = vld [vmem:[%s7 + $0x14] sm:$0xf]
  %v279 = vld [vmem:[%s7 + $0x18] sm:$0xff]
  %v280 = vld [vmem:[%s7 + $0x20] sm:$0xf]
  %v281 = vld [vmem:[%s7 + $0x24] sm:$0xff]
  %v282 = vld [vmem:[%s7 + $0x2c] sm:$0xf]
  %v283 = vld [vmem:[%s7 + $0x30] sm:$0xff]
  %v284 = vld [vmem:[%s7 + $0x38] sm:$0xf]
  %v285 = vld [vmem:[%s7 + $0x3c] sm:$0xff]
  %v286 = vld [vmem:[%s7 + $0x44] sm:$0xf]
  %v287 = vld [vmem:[%s7 + $0x48] sm:$0xff]
  %v288 = vld [vmem:[%s7 + $0x50] sm:$0xf]
  %v289 = vld [vmem:[%s7 + $0x54] sm:$0xff]
  %v290 = vld [vmem:[%s7 + $0x5c] sm:$0xf]
  %v291 = vld [vmem:[%s8] sm:$0x7]
  %v293 = vlaneseq
  %v294 = vshrl.u32 %v293, 7
  %v295 = vsub.s32 0, %v294
  %v296 = vrot.slane %v291, %v295
  %v297 = vlaneseq
  %v298 = vshrl.u32 %v297, 7
  %v299 = vsub.s32 1, %v298
  %v300 = vrot.slane %v291, %v299
  %v301 = vlaneseq
  %v302 = vshrl.u32 %v301, 7
  %v303 = vsub.s32 2, %v302
  %v304 = vrot.slane %v291, %v303
  %v324 = vunpack.c.l.b16 %v275
  %v325 = vunpack.c.h.b16 %v275
  %v326 = vunpack.c.l.b16 %v276
  %v327 = vunpack.c.l.b16 %v277
  %v328 = vunpack.c.h.b16 %v277
  %v329 = vunpack.c.l.b16 %v278
  %v330 = vunpack.c.l.b16 %v279
  %v331 = vunpack.c.h.b16 %v279
  %v332 = vunpack.c.l.b16 %v280
  %v333 = vunpack.c.l.b16 %v281
  %v334 = vunpack.c.h.b16 %v281
  %v335 = vunpack.c.l.b16 %v282
  %v336 = vunpack.c.l.b16 %v283
  %v337 = vunpack.c.h.b16 %v283
  %v338 = vunpack.c.l.b16 %v284
  %v339 = vunpack.c.l.b16 %v285
  %v340 = vunpack.c.h.b16 %v285
  %v341 = vunpack.c.l.b16 %v286
  %v342 = vunpack.c.l.b16 %v287
  %v343 = vunpack.c.h.b16 %v287
  %v344 = vunpack.c.l.b16 %v288
  %v345 = vunpack.c.l.b16 %v289
  %v346 = vunpack.c.h.b16 %v289
  %v347 = vunpack.c.l.b16 %v290
  %v348 = vpack.c.b16 %v327, %v324
  %v349 = vpack.c.b16 %v328, %v325
  %v350 = vpack.c.b16 %v329, %v326
  %v351 = vpack.c.b16 %v333, %v330
  %v352 = vpack.c.b16 %v334, %v331
  %v353 = vpack.c.b16 %v335, %v332
  %v354 = vpack.c.b16 %v339, %v336
  %v355 = vpack.c.b16 %v340, %v337
  %v356 = vpack.c.b16 %v341, %v338
  %v357 = vpack.c.b16 %v345, %v342
  %v358 = vpack.c.b16 %v346, %v343
  %v359 = vpack.c.b16 %v347, %v344
  %v373 = vsel %vm228, %v274, 0
  %375 = vmatprep.subr.bf16.mxu0 %v349
  %376 = vmatpush1.bf16.msra.mxu0 %v348
  %377 = vmatprep.subr.bf16.mxu0 %v352
  %378 = vmatpush1.bf16.msra.mxu0 %v351
  %379 = vmatprep.subr.bf16.mxu0 %v355
  %380 = vmatpush1.bf16.msra.mxu0 %v354
  %381 = vmatprep.subr.bf16.mxu0 %v358
  %382 = vmatpush1.bf16.msra.mxu0 %v357
  %383 = vmatprep.subr.bf16.mxu0 0
  %384 = vmatpush1.bf16.msra.mxu0 0
  %385 = vmatprep.subr.bf16.mxu0 0
  %386 = vmatpush1.bf16.msra.mxu0 0
  %387 = vmatprep.subr.bf16.mxu0 0
  %388 = vmatpush1.bf16.msra.mxu0 0
  %389 = vmatprep.subr.bf16.mxu0 0
  %390 = vmatpush1.bf16.msra.mxu0 0
  %391 = vmatprep.subr.bf16.mxu0 0
  %392 = vmatpush1.bf16.msra.mxu0 0
  %393 = vmatprep.subr.bf16.mxu0 0
  %394 = vmatpush1.bf16.msra.mxu0 0
  %395 = vmatprep.subr.bf16.mxu0 0
  %396 = vmatpush1.bf16.msra.mxu0 0
  %397 = vmatprep.subr.bf16.mxu0 0
  %398 = vmatpush1.bf16.msra.mxu0 0
  %399 = vmatprep.subr.bf16.mxu0 0
  %400 = vmatpush1.bf16.msra.mxu0 0
  %401 = vmatprep.subr.bf16.mxu0 0
  %402 = vmatpush1.bf16.msra.mxu0 0
  %403 = vmatprep.subr.bf16.mxu0 0
  %404 = vmatpush1.bf16.msra.mxu0 0
  %405 = vmatprep.subr.bf16.mxu0 0
  %406 = vmatpush1.bf16.msra.mxu0 0
  %407 = vmatprep.mubr.bf16.mxu0 0
  %408 = vmatmul.mubr.bf16.gmra.mrb[0].mxu0 %v373
  %v409 = vpop.f32.mrb[0].mxu0
  %v410 = vadd.f32 %v296, %v409
  %v411 = vpop.f32.mrb[0].mxu0
  %v412 = vadd.f32 %v300, %v411
  %v413 = vpop.f32.mrb[0].mxu0
  %v414 = vadd.f32 %v296, %v413
  %v415 = vpop.f32.mrb[0].mxu0
  %v416 = vadd.f32 %v300, %v415
  %417 = vdwg.mxu0
  %418 = vmatprep.subr.bf16.mxu0 0
  %419 = vmatpush1.bf16.msra.mxu0 %v350
  %420 = vmatprep.subr.bf16.mxu0 0
  %421 = vmatpush1.bf16.msra.mxu0 %v353
  %422 = vmatprep.subr.bf16.mxu0 0
  %423 = vmatpush1.bf16.msra.mxu0 %v356
  %424 = vmatprep.subr.bf16.mxu0 0
  %425 = vmatpush1.bf16.msra.mxu0 %v359
  %426 = vmatprep.subr.bf16.mxu0 0
  %427 = vmatpush1.bf16.msra.mxu0 0
  %428 = vmatprep.subr.bf16.mxu0 0
  %429 = vmatpush1.bf16.msra.mxu0 0
  %430 = vmatprep.subr.bf16.mxu0 0
  %431 = vmatpush1.bf16.msra.mxu0 0
  %432 = vmatprep.subr.bf16.mxu0 0
  %433 = vmatpush1.bf16.msra.mxu0 0
  %434 = vmatprep.subr.bf16.mxu0 0
  %435 = vmatpush1.bf16.msra.mxu0 0
  %436 = vmatprep.subr.bf16.mxu0 0
  %437 = vmatpush1.bf16.msra.mxu0 0
  %438 = vmatprep.subr.bf16.mxu0 0
  %439 = vmatpush1.bf16.msra.mxu0 0
  %440 = vmatprep.subr.bf16.mxu0 0
  %441 = vmatpush1.bf16.msra.mxu0 0
  %442 = vmatprep.subr.bf16.mxu0 0
  %443 = vmatpush1.bf16.msra.mxu0 0
  %444 = vmatprep.subr.bf16.mxu0 0
  %445 = vmatpush1.bf16.msra.mxu0 0
  %446 = vmatprep.subr.bf16.mxu0 0
  %447 = vmatpush1.bf16.msra.mxu0 0
  %448 = vmatprep.subr.bf16.mxu0 0
  %449 = vmatpush1.bf16.msra.mxu0 0
  %450 = vmatprep.mubr.bf16.mxu0 0
  %451 = vmatmul.mubr.bf16.gmra.mrb[0].mxu0 %v373
  %v452 = vpop.f32.mrb[0].mxu0
  %v453 = vadd.f32 %v304, %v452
  %v454 = vpop.f32.mrb[0].mxu0
  %v455 = vpop.f32.mrb[0].mxu0
  %v456 = vadd.f32 %v304, %v455
  %v457 = vpop.f32.mrb[0].mxu0
  %458 = vdwg.mxu0
  %v459 = vpack.c.bf16 %v414, %v410
  %v460 = vpack.c.bf16 %v416, %v412
  %v461 = vpack.c.bf16 %v456, %v453
  %v465 = vunpack.c.l.b16 %v459
  %v466 = vunpack.c.l.b16 %v460
  %v467 = vunpack.c.l.b16 %v461
  %v468 = vunpack.c.h.b16 %v459
  %v469 = vunpack.c.h.b16 %v460
  %v470 = vunpack.c.h.b16 %v461
  %v471 = vpack.c.b16 %v466, %v465
  %v472 = vpack.c.b16 %v467, %v467
  %v473 = vpack.c.b16 %v469, %v468
  %v474 = vpack.c.b16 %v470, %v470
  %479 = vst [vmem:[%s9] sm:$0xff] %v471
  %480 = vst [vmem:[%s9 + $0x8] sm:$0xf] %v472
  %481 = vst [vmem:[%s9 + $0xc] sm:$0xff] %v473
  %482 = vst [vmem:[%s9 + $0x14] sm:$0xf] %v474
  // Predicated region
  $region38: #{parameter_generator_forward.1} parent=0 // pred_check
    _
  $region39: #{parameter_generator_forward.1} parent=0 // pred_check_branch
    %484 = sbr.rel (0) target = $region41
  $region40: #{parameter_generator_forward.1} parent=0 // pred_region
    _
  $region41: #{parameter_generator_forward.1} parent=0 // pred_fallthru
    _
  // Predicated region
  $region42: #{parameter_generator_forward.1} parent=0 // pred_check
    _
  $region43: #{parameter_generator_forward.1} parent=0 // pred_check_branch
    %486 = sbr.rel (0) target = $region45
  $region44: #{parameter_generator_forward.1} parent=0 // pred_region
    _
  $region45: #{parameter_generator_forward.1} parent=0 // pred_fallthru
    _

</llo_original>
